<compile_context>
chip_gen: v6e
topology: v6e:2x2x1
jax: 0.10.0
libtpu: 0.0.40
codegen_flags: <defaults>
</compile_context>

<pallas_src>
import math

import jax
import jax.numpy as jnp
from jax import lax
from jax.experimental import pallas as pl
from jax.experimental.pallas import tpu as pltpu


# ----------------------------------------------------------------------------
# Sinusoidal table (parameter/buffer setup == glue, plain JAX).
# ----------------------------------------------------------------------------
def make_pos_encoding(seq_length: int, d_input: int) -> jnp.ndarray:
    """Deterministic sinusoidal table, identical math to the torch __init__."""
    pos = jnp.arange(0, seq_length, dtype=jnp.float32)[:, None]            # (S, 1)
    denom = jnp.exp(
        jnp.arange(0, d_input, 2, dtype=jnp.float32)
        * (-math.log(10000.0) / d_input)
    )                                                                       # (D/2,)
    pe = jnp.zeros((seq_length, d_input), dtype=jnp.float32)
    pe = pe.at[:, 0::2].set(jnp.sin(pos * denom))
    pe = pe.at[:, 1::2].set(jnp.cos(pos * denom))
    return pe[None, :, :]                                                   # (1, S, D)


# ----------------------------------------------------------------------------
# Tiling helpers.
# ----------------------------------------------------------------------------
_TARGET_BLOCK_ELEMS = 256 * 1024  # ~1 MiB f32 per x block; ~5-6 MiB total with
                                  # double buffering + mask temps -> fits every gen.


def _largest_divisor_leq(n: int, cap: int, multiple_of: int):
    """Largest divisor of n that is <= cap and a multiple of `multiple_of`."""
    best = None
    d = 1
    while d * d <= n:
        if n % d == 0:
            for t in (d, n // d):
                if t <= cap and t % multiple_of == 0:
                    if best is None or t > best:
                        best = t
        d += 1
    return best


def _choose_flat_tile(n_flat: int, batch: int) -> int:
    cap = max(128, _TARGET_BLOCK_ELEMS // max(batch, 1))
    if n_flat <= cap:
        return n_flat
    t = _largest_divisor_leq(n_flat, cap, 128)   # lane-dense tile (multiple of 128)
    # No lane-dense divisor under the cap -> fall back to the full row (still
    # correct; realistic transformer S*D are multiples of 128 anyway).
    return t if t is not None else n_flat


# ----------------------------------------------------------------------------
# Kernel.
# ----------------------------------------------------------------------------
def _mix32(v):
    """murmur3-style 32-bit finalizer — cheap VPU ops, good avalanche."""
    v = v ^ (v >> 16)
    v = v * jnp.uint32(0x7FEB352D)
    v = v ^ (v >> 15)
    v = v * jnp.uint32(0x846CA68B)
    v = v ^ (v >> 16)
    return v


def _pe_kernel_factory(p_dropout: float, apply_dropout: bool, n_flat: int, tile: int):
    keep_scale = 1.0 / (1.0 - p_dropout) if apply_dropout else 1.0
    # Drop iff top-24 hash bits < threshold  (P ≈ p_dropout, quantized to 2^-24).
    threshold24 = min(int(round(p_dropout * (1 << 24))), (1 << 24) - 1)

    def kernel(seed_ref, x_ref, pe_ref, o_ref):
        # x_ref: (B, T), pe_ref: (1, T) — broadcast add over the batch rows.
        out = x_ref[...].astype(jnp.float32) + pe_ref[...].astype(jnp.float32)
        if apply_dropout:
            b, t = x_ref.shape
            c = pl.program_id(0)
            rows = lax.broadcasted_iota(jnp.int32, (b, t), 0)
            cols = lax.broadcasted_iota(jnp.int32, (b, t), 1)
            # Global element index (unique per element of the whole tensor) XOR'd
            # with the pre-mixed seed, then hashed: independent streams per
            # element, per chunk and per batch row — no additive seed collisions.
            gidx = (rows * n_flat + cols + c * tile) ^ seed_ref[0]
            bits = _mix32(_mix32(gidx.astype(jnp.uint32)))
            # Integer-threshold compare (no u32->f32 convert, no float uniform).
            u24 = (bits >> 8).astype(jnp.int32)
            keep = u24 >= threshold24
            out = jnp.where(keep, out * jnp.float32(keep_scale), jnp.float32(0.0))
        o_ref[...] = out.astype(o_ref.dtype)

    return kernel


def _pallas_positional_encoding(x, pos_encoding, *, p_dropout, apply_dropout, seed=0):
    """Always runs the Pallas kernel.  x: (B, S, D) -> (B, S, D)."""
    B, S, D = x.shape
    assert pos_encoding.shape == (1, S, D)
    N = S * D
    T = _choose_flat_tile(N, B)
    num_chunks = N // T

    # Lane-dense 2D views: x (B, N), pe (1, N).  PE is cast to the activation
    # dtype so its HBM traffic shrinks with bf16 activations; the add is in f32.
    x2 = x.reshape(B, N)
    pe2 = pos_encoding.astype(x.dtype).reshape(1, N)

    # Mix the seed on the host side; keep it non-negative int32 for SMEM.
    seed_u = jnp.asarray(seed, dtype=jnp.uint32)
    seed_mixed = seed_u * jnp.uint32(0x9E3779B9) + jnp.uint32(0x85EBCA6B)
    seed_smem = (seed_mixed & jnp.uint32(0x7FFFFFFF)).astype(jnp.int32).reshape(1)

    kernel = _pe_kernel_factory(float(p_dropout), bool(apply_dropout), N, T)

    grid_spec = pltpu.PrefetchScalarGridSpec(
        num_scalar_prefetch=1,                       # seed lands in SMEM
        grid=(num_chunks,),
        in_specs=[
            pl.BlockSpec((B, T), lambda c, seed: (0, c)),   # x chunk (all batch rows)
            pl.BlockSpec((1, T), lambda c, seed: (0, c)),   # PE chunk (read once/chunk)
        ],
        out_specs=pl.BlockSpec((B, T), lambda c, seed: (0, c)),
    )

    out2 = pl.pallas_call(
        kernel,
        out_shape=jax.ShapeDtypeStruct((B, N), x.dtype),
        grid_spec=grid_spec,
        compiler_params=pltpu.CompilerParams(
            dimension_semantics=("parallel",),       # no cross-step state -> megacore OK
            vmem_limit_bytes=32 * 1024 * 1024,       # explicit budget, blocks are ~MiB-scale
        ),
    )(seed_smem, x2, pe2)
    return out2.reshape(B, S, D)


def positional_encoding_forward(x, pos_encoding, *, p_dropout, training, seed=0):
    """Public forward matching the PyTorch module semantics."""
    if (not training) or p_dropout <= 0.0:
        # Bare elementwise add — let XLA fuse it with neighbors instead of paying
        # an extra un-fusable HBM round trip through a standalone pallas_call.
        return x + pos_encoding.astype(x.dtype)
    return _pallas_positional_encoding(
        x, pos_encoding, p_dropout=p_dropout, apply_dropout=True, seed=seed
    )


# ----------------------------------------------------------------------------
# Self-test.
# ----------------------------------------------------------------------------
if __name__ == "__main__":
    # Small shapes consistent with the module: batch=2, seq_length=8, d_input=32.
    B, S, D = 2, 8, 32
    P_DROPOUT = 0.1

    key = jax.random.PRNGKey(0)
    x = jax.random.normal(key, (B, S, D), dtype=jnp.float32)
    pe = make_pos_encoding(S, D)
    ref = x + pe

    # 1) Run the kernel with dropout compiled out — exact check of the add path,
    #    flattening/tiling plumbing and PE alignment.
    out_add = _pallas_positional_encoding(x, pe, p_dropout=P_DROPOUT, apply_dropout=False)
    out_add = jax.block_until_ready(out_add)
    assert out_add.shape == (B, S, D)
    assert jnp.allclose(out_add, ref, atol=1e-6), "kernel add path mismatch"

    # 2) Public eval path (plain fusable JAX) matches the reference too.
    out_eval = positional_encoding_forward(x, pe, p_dropout=P_DROPOUT, training=False)
    assert jnp.allclose(out_eval, ref, atol=1e-6), "eval path mismatch"

    # 3) Training pass through the kernel (dropout active, deterministic seed).
    out_train = positional_encoding_forward(
        x, pe, p_dropout=P_DROPOUT, training=True, seed=1234
    )
    out_train = jax.block_until_ready(out_train)
    assert out_train.shape == (B, S, D)

    # Surviving elements must equal (x + pe) / (1 - p); dropped elements are 0.
    scaled_ref = ref / (1.0 - P_DROPOUT)
    dropped = jnp.isclose(out_train, 0.0, atol=1e-6)
    kept_ok = jnp.isclose(out_train, scaled_ref, rtol=1e-5, atol=1e-5)
    assert bool(jnp.all(jnp.logical_or(dropped, kept_ok))), "dropout semantics violated"

    # Loose sanity check on the drop rate (expected ~10% of 512 elements).
    n_drop = int(jnp.sum(dropped))
    total = B * S * D
    assert 0 < n_drop < total // 2, f"implausible drop count {n_drop}/{total}"

    print("KERNEL_OK")
</pallas_src>

<mosaic_0001>
module attributes {stable_mosaic.version = 11 : i64} {
  func.func @kernel(%arg0: i32, %arg1: memref<1xi32, #tpu.memory_space<smem>>, %arg2: memref<2x256xf32, #tpu.memory_space<vmem>>, %arg3: memref<1x256xf32, #tpu.memory_space<vmem>>, %arg4: memref<2x256xf32, #tpu.memory_space<vmem>>) attributes {dimension_semantics = [#tpu.dimension_semantics<parallel>], iteration_bounds = array<i64: 1>, scalar_prefetch = 1 : i64, scratch_operands = 0 : i64, tpu.core_type = #tpu.core_type<tc>, window_params = [{transform_indices = @transform_0, window_bounds = array<i64: 2, 256>}, {transform_indices = @transform_1, window_bounds = array<i64: 1, 256>}, {transform_indices = @transform_2, window_bounds = array<i64: 2, 256>}]} {
    %c0 = arith.constant 0 : index
    %c0_0 = arith.constant 0 : index
    %0 = vector.load %arg2[%c0, %c0_0] : memref<2x256xf32, #tpu.memory_space<vmem>>, vector<2x256xf32>
    %c0_1 = arith.constant 0 : index
    %c0_2 = arith.constant 0 : index
    %1 = vector.load %arg3[%c0_1, %c0_2] : memref<1x256xf32, #tpu.memory_space<vmem>>, vector<1x256xf32>
    %2 = vector.broadcast %1 : vector<1x256xf32> to vector<2x256xf32>
    %3 = arith.addf %0, %2 : vector<2x256xf32>
    %c0_3 = arith.constant 0 : index
    %c0_4 = arith.constant 0 : index
    %4 = vector.load %arg4[%c0_3, %c0_4] : memref<2x256xf32, #tpu.memory_space<vmem>>, vector<2x256xf32>
    tpu.vector_store %arg4[%c0_3, %c0_4], %3 {strides = array<i32>} : memref<2x256xf32, #tpu.memory_space<vmem>>, vector<2x256xf32>,
    return
  }
  func.func @transform_0(%arg0: i32, %arg1: memref<1xi32, #tpu.memory_space<smem>>) -> (i32, i32) {
    %c0_i32 = arith.constant 0 : i32
    %c0_i32_0 = arith.constant 0 : i32
    return %c0_i32, %arg0 : i32, i32
  }
  func.func @transform_1(%arg0: i32, %arg1: memref<1xi32, #tpu.memory_space<smem>>) -> (i32, i32) {
    %c0_i32 = arith.constant 0 : i32
    %c0_i32_0 = arith.constant 0 : i32
    return %c0_i32, %arg0 : i32, i32
  }
  func.func @transform_2(%arg0: i32, %arg1: memref<1xi32, #tpu.memory_space<smem>>) -> (i32, i32) {
    %c0_i32 = arith.constant 0 : i32
    %c0_i32_0 = arith.constant 0 : i32
    return %c0_i32, %arg0 : i32, i32
  }
}

</mosaic_0001>

<llo_original>
// kernel: tpu_custom_call.1
$region0: #{tpu_custom_call.1}
  #allocation0 [shape = 'u32[]', space=smem, size = 0x4, offset = 0x4, fixed_abs, tag = 'smem constant byte address 0x4 - core index']
  #allocation1 [shape = 'u32[144,128]{1,0:T(1,128)}', space=vmem, size = 0x12000, scoped, tag = 'internal scratch']
  #allocation2 [shape = 's32[1]{0}', space=sflag, size = 0x4, scoped, tag = 'scoped memory for tpu_custom_call.1']
  #allocation3 [shape = 's32[1]{0:T(128)S(6)}', space=smem, size = 0x200, scoped, tag = 'prefetched SMEM operand 0']
  %s0 = inlined_call_operand.<no memory space> [shape: s32[1], index: 0, kind: input, shape index: {}]
  %s1 = inlined_call_operand.hbm [shape: f32[2,256], index: 1, kind: input, shape index: {}]
  %s2 = inlined_call_operand.vmem [shape: f32[1,256], index: 2, kind: input, shape index: {}]
  %s3 = inlined_call_operand.hbm [shape: f32[2,256], index: 3, kind: output, shape index: {}]
  %s4 = sld [smem:[#allocation0]]
  $region22: #{tpu_custom_call.1} parent=0
    _
  %s6 = ssub.s32 1, %s4
  %s7 = scalar_select 0, %s6, %s4
  %8 = sst [smem:[#allocation3]] %s0
  $region1: #{tpu_custom_call.1} parent=0
    #allocation4 [shape = 'u8[2048]{0}', space=vmem, size = 0x800, scoped, tag = 'input window, operand 1, single buffered']
    #allocation5 [shape = 's32[1]{0}', space=sflag, size = 0x4, scoped, tag = 'scoped memory for tpu_custom_call.1']
    #allocation6 [shape = 's32[1]{0}', space=sflag, size = 0x4, scoped, tag = 'scoped memory for tpu_custom_call.1']
    #allocation7 [shape = 'u8[2048]{0}', space=vmem, size = 0x800, scoped, tag = 'output window, operand 0, single buffered']
    %9 = vsyncpa [#allocation5], 0
    %10 = vsyncpa [#allocation6], 0
    // Predicated region
    $region2: #{tpu_custom_call.1} parent=1 // pred_check
      _
    $region3: #{tpu_custom_call.1} parent=1 // pred_check_branch
      %12 = sbr.rel (0) target = $region5
    $region4: #{tpu_custom_call.1} parent=1 // pred_region
      %s14 = ssub.s32 64, 64
      %15 = vsyncadd [#allocation5], %s14
      %s17 = sshll.u32 [#allocation4], 4
      %s18 = int_to_ptr.vmem [resolvable:$true] %s17
      %20 = dma.hbm_to_vmem [thread:$0]  %s1, 64, %s18, [#allocation5]
    $region5: #{tpu_custom_call.1} parent=1 // pred_fallthru
      _
    // Predicated region
    $region6: #{tpu_custom_call.1} parent=1 // pred_check
      _
    $region7: #{tpu_custom_call.1} parent=1 // pred_check_branch
      %22 = sbr.rel (0) target = $region9
    $region8: #{tpu_custom_call.1} parent=1 // pred_region
      _
    $region9: #{tpu_custom_call.1} parent=1 // pred_fallthru
      _
    // Predicated region
    $region10: #{tpu_custom_call.1} parent=1 // pred_check
      _
    $region11: #{tpu_custom_call.1} parent=1 // pred_check_branch
      %24 = sbr.rel (0) target = $region13
    $region12: #{tpu_custom_call.1} parent=1 // pred_region
      %25 = dma.done [#allocation5], 64
    $region13: #{tpu_custom_call.1} parent=1 // pred_fallthru
      _
    %v26 = vld [vmem:[#allocation4] sm:$0xf]
    %v27 = vld [vmem:[%s2] sm:$0x3]
    %v29 = vlaneseq
    %v30 = vshrl.u32 %v29, 7
    %v31 = vsub.s32 0, %v30
    %v32 = vrot.slane %v27, %v31
    %v33 = vlaneseq
    %v34 = vshrl.u32 %v33, 7
    %v35 = vsub.s32 1, %v34
    %v36 = vrot.slane %v27, %v35
    %v37 = vcombine.low %v32, %v36
    %v39 = vunpack.c.l.s4 1983009808
    %v40 = vunpack.c.0.s8 %v39
    %v41 = vlaneseq
    %v42 = vshrl.u32 %v41, 7
    %v43 = vsub.s32 %v40, %v42
    %v44 = vrot.slane %v37, %v43
    %v46 = vadd.f32 %v26, %v44
    %47 = vst [vmem:[#allocation7] sm:$0xf] %v46
    // Predicated region
    $region14: #{tpu_custom_call.1} parent=1 // pred_check
      _
    $region15: #{tpu_custom_call.1} parent=1 // pred_check_branch
      %49 = sbr.rel (0) target = $region17
    $region16: #{tpu_custom_call.1} parent=1 // pred_region
      %s51 = ssub.s32 64, 64
      %52 = vsyncadd [#allocation6], %s51
      %s54 = sshll.u32 [#allocation7], 4
      %s55 = int_to_ptr.vmem [resolvable:$true] %s54
      %57 = dma.vmem_to_hbm [thread:$0]  %s55, 64, %s3, [#allocation6]
    $region17: #{tpu_custom_call.1} parent=1 // pred_fallthru
      _
    // Predicated region
    $region18: #{tpu_custom_call.1} parent=1 // pred_check
      _
    $region19: #{tpu_custom_call.1} parent=1 // pred_check_branch
      %59 = sbr.rel (0) target = $region21
    $region20: #{tpu_custom_call.1} parent=1 // pred_region
      %60 = dma.done [#allocation6], 64
    $region21: #{tpu_custom_call.1} parent=1 // pred_fallthru
      _
    %61 = vsyncpa [#allocation5], 1
    %62 = vsyncpa [#allocation6], 1

</llo_original>
